<compile_context>
chip_gen: v5e
topology: v5e:2x2
jax: 0.10.0
libtpu: 0.0.40
codegen_flags: <defaults>
</compile_context>

<pallas_src>
import jax
import jax.numpy as jnp
from jax.experimental import pallas as pl
from jax.experimental.pallas import tpu as pltpu

HIDDEN = 100
HIDDEN_PAD = 128
NOUT = 2
NOUT_PAD = 128
IN_DIM = 784


def _round_up(x, m):
    return ((x + m - 1) // m) * m


def _mlp_kernel(x_ref, w1_ref, b1_ref, w2_ref, b2_ref, o_ref):
    # hidden = relu(x @ W1 + b1)   (bf16 inputs, f32 accumulate)
    h = jnp.dot(x_ref[...], w1_ref[...], preferred_element_type=jnp.float32)
    h = jnp.maximum(h + b1_ref[...], 0.0)                 # (TILE_B,128)+(1,128)
    # out = h @ W2 + b2  (cast h back to bf16 for the MXU, accumulate f32)
    out = jnp.dot(h.astype(jnp.bfloat16), w2_ref[...],
                  preferred_element_type=jnp.float32)
    o_ref[...] = (out + b2_ref[...]).astype(o_ref.dtype)  # lane-dense 128-wide store


def simple_mlp_forward(x, w1, b1, w2, b2, *, tile_b=1024):
    """x: (B, 1, 28, 28) or anything flattening to (B, 784) row-major.
    w1: (784, 100), b1: (1, 100), w2: (100, 2), b2: (1, 2)  (f32).
    Returns (B, 2) f32 logits, same semantics as the PyTorch module."""
    xf = x.reshape(-1, IN_DIM).astype(jnp.float32)
    B = xf.shape[0]

    # Pick a batch tile: multiple of 8 (sublane), <= tile_b, pad B up to it.
    tile_b = min(tile_b, _round_up(B, 8))
    Bp = _round_up(B, tile_b)
    if Bp != B:
        xf = jnp.pad(xf, ((0, Bp - B), (0, 0)))
    xf = xf.astype(jnp.bfloat16)

    # Zero-pad params to 128-wide lane-dense tiles (exact: ReLU(0)=0, zero rows).
    w1p = jnp.pad(w1.astype(jnp.bfloat16), ((0, 0), (0, HIDDEN_PAD - HIDDEN)))
    b1p = jnp.pad(b1.astype(jnp.float32), ((0, 0), (0, HIDDEN_PAD - HIDDEN)))
    w2p = jnp.pad(w2.astype(jnp.bfloat16),
                  ((0, HIDDEN_PAD - HIDDEN), (0, NOUT_PAD - NOUT)))
    b2p = jnp.pad(b2.astype(jnp.float32), ((0, 0), (0, NOUT_PAD - NOUT)))

    grid = (Bp // tile_b,)
    bytes_accessed = (Bp * IN_DIM * 2            # x (bf16)
                      + IN_DIM * HIDDEN_PAD * 2  # W1
                      + HIDDEN_PAD * NOUT_PAD * 2
                      + 2 * (HIDDEN_PAD + NOUT_PAD) * 4
                      + Bp * NOUT_PAD * 4)       # out (f32)
    flops = 2 * Bp * IN_DIM * HIDDEN_PAD + 2 * Bp * HIDDEN_PAD * NOUT_PAD

    out = pl.pallas_call(
        _mlp_kernel,
        out_shape=jax.ShapeDtypeStruct((Bp, NOUT_PAD), jnp.float32),
        grid_spec=pltpu.PrefetchScalarGridSpec(
            num_scalar_prefetch=0,
            grid=grid,
            in_specs=[
                pl.BlockSpec((tile_b, IN_DIM), lambda i: (i, 0)),        # x tile
                pl.BlockSpec((IN_DIM, HIDDEN_PAD), lambda i: (0, 0)),    # W1 (resident)
                pl.BlockSpec((1, HIDDEN_PAD), lambda i: (0, 0)),         # b1 (resident)
                pl.BlockSpec((HIDDEN_PAD, NOUT_PAD), lambda i: (0, 0)),  # W2 (resident)
                pl.BlockSpec((1, NOUT_PAD), lambda i: (0, 0)),           # b2 (resident)
            ],
            out_specs=pl.BlockSpec((tile_b, NOUT_PAD), lambda i: (i, 0)),
        ),
        compiler_params=pltpu.CompilerParams(
            dimension_semantics=("parallel",),
            vmem_limit_bytes=32 * 1024 * 1024,
        ),
        cost_estimate=pl.CostEstimate(
            flops=flops, transcendentals=0, bytes_accessed=bytes_accessed),
    )(xf, w1p, b1p, w2p, b2p)

    return out[:B, :NOUT]


def init_params(key):
    """Mimics torch.nn.Linear default init: U[-1/sqrt(fan_in), 1/sqrt(fan_in)]."""
    k1, k2, k3, k4 = jax.random.split(key, 4)
    bound1 = 1.0 / jnp.sqrt(784.0)
    bound2 = 1.0 / jnp.sqrt(100.0)
    w1 = jax.random.uniform(k1, (IN_DIM, HIDDEN), jnp.float32, -bound1, bound1)
    b1 = jax.random.uniform(k2, (1, HIDDEN), jnp.float32, -bound1, bound1)
    w2 = jax.random.uniform(k3, (HIDDEN, NOUT), jnp.float32, -bound2, bound2)
    b2 = jax.random.uniform(k4, (1, NOUT), jnp.float32, -bound2, bound2)
    return w1, b1, w2, b2


def _ref_f32(xf, w1, b1, w2, b2):
    return jnp.maximum(xf @ w1 + b1, 0.0) @ w2 + b2


def _ref_bf16(xf, w1, b1, w2, b2):
    # Emulates the kernel's numerics: bf16 operands, f32 accumulation.
    xb = xf.astype(jnp.bfloat16).astype(jnp.float32)
    w1b = w1.astype(jnp.bfloat16).astype(jnp.float32)
    w2b = w2.astype(jnp.bfloat16).astype(jnp.float32)
    h = jnp.maximum(xb @ w1b + b1, 0.0)
    return h.astype(jnp.bfloat16).astype(jnp.float32) @ w2b + b2


if __name__ == "__main__":
    key = jax.random.PRNGKey(0)
    kx, kp = jax.random.split(key)
    w1, b1, w2, b2 = init_params(kp)

    # Small MNIST-shaped batch: (B, 1, 28, 28) -> 784 per example.
    x = jax.random.normal(kx, (4, 1, 28, 28), jnp.float32)
    out = jax.block_until_ready(simple_mlp_forward(x, w1, b1, w2, b2))
    xf = x.reshape(-1, IN_DIM)
    assert out.shape == (4, NOUT)
    assert jnp.allclose(out, _ref_bf16(xf, w1, b1, w2, b2), atol=2e-3, rtol=2e-3)
    assert jnp.allclose(out, _ref_f32(xf, w1, b1, w2, b2), atol=5e-2, rtol=5e-2)

    # Exercise the multi-tile grid path with a ragged batch (300 -> pad to 384).
    x2 = jax.random.normal(jax.random.PRNGKey(1), (300, 1, 28, 28), jnp.float32)
    out2 = jax.block_until_ready(
        simple_mlp_forward(x2, w1, b1, w2, b2, tile_b=128))
    xf2 = x2.reshape(-1, IN_DIM)
    assert out2.shape == (300, NOUT)
    assert jnp.allclose(out2, _ref_bf16(xf2, w1, b1, w2, b2), atol=2e-3, rtol=2e-3)
    assert jnp.allclose(out2, _ref_f32(xf2, w1, b1, w2, b2), atol=5e-2, rtol=5e-2)

    print("KERNEL_OK")
</pallas_src>

<mosaic_0001>
module attributes {stable_mosaic.version = 11 : i64} {
  func.func @_mlp_kernel(%arg0: i32, %arg1: memref<8x784xbf16, #tpu.memory_space<vmem>>, %arg2: memref<784x128xbf16, #tpu.memory_space<vmem>>, %arg3: memref<1x128xf32, #tpu.memory_space<vmem>>, %arg4: memref<128x128xbf16, #tpu.memory_space<vmem>>, %arg5: memref<1x128xf32, #tpu.memory_space<vmem>>, %arg6: memref<8x128xf32, #tpu.memory_space<vmem>>) attributes {dimension_semantics = [#tpu.dimension_semantics<parallel>], iteration_bounds = array<i64: 1>, scalar_prefetch = 0 : i64, scratch_operands = 0 : i64, tpu.core_type = #tpu.core_type<tc>, window_params = [{transform_indices = @transform_0, window_bounds = array<i64: 8, 784>}, {pipeline_mode = #tpu.pipeline_mode<synchronous>, transform_indices = @transform_1, window_bounds = array<i64: 784, 128>}, {pipeline_mode = #tpu.pipeline_mode<synchronous>, transform_indices = @transform_2, window_bounds = array<i64: 1, 128>}, {pipeline_mode = #tpu.pipeline_mode<synchronous>, transform_indices = @transform_3, window_bounds = array<i64: 128, 128>}, {pipeline_mode = #tpu.pipeline_mode<synchronous>, transform_indices = @transform_4, window_bounds = array<i64: 1, 128>}, {transform_indices = @transform_5, window_bounds = array<i64: 8, 128>}]} {
    %c0 = arith.constant 0 : index
    %c0_0 = arith.constant 0 : index
    %0 = vector.load %arg1[%c0, %c0_0] : memref<8x784xbf16, #tpu.memory_space<vmem>>, vector<8x784xbf16>
    %c0_1 = arith.constant 0 : index
    %c0_2 = arith.constant 0 : index
    %1 = vector.load %arg2[%c0_1, %c0_2] : memref<784x128xbf16, #tpu.memory_space<vmem>>, vector<784x128xbf16>
    %cst = arith.constant dense<0.000000e+00> : vector<8x128xf32>
    %2 = tpu.matmul %0, %1, %cst {dimension_numbers = #tpu.dot_dimension_numbers<[1], [0], [0], [1], [0, 0, 1, 1], [], []>} : vector<8x784xbf16>, vector<784x128xbf16>, vector<8x128xf32> -> vector<8x128xf32>
    %c0_3 = arith.constant 0 : index
    %c0_4 = arith.constant 0 : index
    %3 = vector.load %arg3[%c0_3, %c0_4] : memref<1x128xf32, #tpu.memory_space<vmem>>, vector<1x128xf32>
    %4 = vector.broadcast %3 : vector<1x128xf32> to vector<8x128xf32>
    %5 = arith.addf %2, %4 : vector<8x128xf32>
    %cst_5 = arith.constant 0.000000e+00 : f32
    %6 = vector.broadcast %cst_5 : f32 to vector<8x128xf32>
    %7 = arith.maximumf %5, %6 : vector<8x128xf32>
    %8 = arith.truncf %7 : vector<8x128xf32> to vector<8x128xbf16>
    %c0_6 = arith.constant 0 : index
    %c0_7 = arith.constant 0 : index
    %9 = vector.load %arg4[%c0_6, %c0_7] : memref<128x128xbf16, #tpu.memory_space<vmem>>, vector<128x128xbf16>
    %cst_8 = arith.constant dense<0.000000e+00> : vector<8x128xf32>
    %10 = tpu.matmul %8, %9, %cst_8 {dimension_numbers = #tpu.dot_dimension_numbers<[1], [0], [0], [1], [0, 0, 1, 1], [], []>} : vector<8x128xbf16>, vector<128x128xbf16>, vector<8x128xf32> -> vector<8x128xf32>
    %c0_9 = arith.constant 0 : index
    %c0_10 = arith.constant 0 : index
    %11 = vector.load %arg5[%c0_9, %c0_10] : memref<1x128xf32, #tpu.memory_space<vmem>>, vector<1x128xf32>
    %12 = vector.broadcast %11 : vector<1x128xf32> to vector<8x128xf32>
    %13 = arith.addf %10, %12 : vector<8x128xf32>
    %c0_11 = arith.constant 0 : index
    %c0_12 = arith.constant 0 : index
    %14 = vector.load %arg6[%c0_11, %c0_12] : memref<8x128xf32, #tpu.memory_space<vmem>>, vector<8x128xf32>
    tpu.vector_store %arg6[%c0_11, %c0_12], %13 {strides = array<i32>} : memref<8x128xf32, #tpu.memory_space<vmem>>, vector<8x128xf32>,
    return
  }
  func.func @transform_0(%arg0: i32) -> (i32, i32) {
    %c0_i32 = arith.constant 0 : i32
    %c0_i32_0 = arith.constant 0 : i32
    return %arg0, %c0_i32 : i32, i32
  }
  func.func @transform_1(%arg0: i32) -> (i32, i32) {
    %c0_i32 = arith.constant 0 : i32
    %c0_i32_0 = arith.constant 0 : i32
    %c0_i32_1 = arith.constant 0 : i32
    return %c0_i32, %c0_i32_0 : i32, i32
  }
  func.func @transform_2(%arg0: i32) -> (i32, i32) {
    %c0_i32 = arith.constant 0 : i32
    %c0_i32_0 = arith.constant 0 : i32
    %c0_i32_1 = arith.constant 0 : i32
    return %c0_i32, %c0_i32_0 : i32, i32
  }
  func.func @transform_3(%arg0: i32) -> (i32, i32) {
    %c0_i32 = arith.constant 0 : i32
    %c0_i32_0 = arith.constant 0 : i32
    %c0_i32_1 = arith.constant 0 : i32
    return %c0_i32, %c0_i32_0 : i32, i32
  }
  func.func @transform_4(%arg0: i32) -> (i32, i32) {
    %c0_i32 = arith.constant 0 : i32
    %c0_i32_0 = arith.constant 0 : i32
    %c0_i32_1 = arith.constant 0 : i32
    return %c0_i32, %c0_i32_0 : i32, i32
  }
  func.func @transform_5(%arg0: i32) -> (i32, i32) {
    %c0_i32 = arith.constant 0 : i32
    %c0_i32_0 = arith.constant 0 : i32
    return %arg0, %c0_i32 : i32, i32
  }
}

</mosaic_0001>

<llo_original>
// kernel: tpu_custom_call.1
$region0: #{tpu_custom_call.1}
  #allocation0 [shape = 'u32[]', space=smem, size = 0x4, offset = 0x4, fixed_abs, tag = 'smem constant byte address 0x4 - core index']
  #allocation1 [shape = 'u32[72,128]{1,0:T(1,128)}', space=vmem, size = 0x9000, scoped, tag = 'internal scratch']
  %s0 = inlined_call_operand.hbm [shape: bf16[8,784], index: 0, kind: input, shape index: {}]
  %s1 = inlined_call_operand.hbm [shape: bf16[784,128], index: 1, kind: input, shape index: {}]
  %s2 = inlined_call_operand.vmem [shape: f32[1,128], index: 2, kind: input, shape index: {}]
  %s3 = inlined_call_operand.hbm [shape: bf16[128,128], index: 3, kind: input, shape index: {}]
  %s4 = inlined_call_operand.vmem [shape: f32[1,128], index: 4, kind: input, shape index: {}]
  %s5 = inlined_call_operand.hbm [shape: f32[8,128], index: 5, kind: output, shape index: {}]
  %s6 = sld [smem:[#allocation0]]
  $region42: #{tpu_custom_call.1} parent=0
    _
  %s8 = ssub.s32 1, %s6
  %s9 = scalar_select 0, %s8, %s6
  $region1: #{tpu_custom_call.1} parent=0
    #allocation2 [shape = 'u8[14336]{0}', space=vmem, size = 0x3800, scoped, tag = 'input window, operand 0, single buffered']
    #allocation3 [shape = 's32[1]{0}', space=sflag, size = 0x4, scoped, tag = 'scoped memory for tpu_custom_call.1']
    #allocation4 [shape = 's32[1]{0}', space=sflag, size = 0x4, scoped, tag = 'scoped memory for tpu_custom_call.1']
    #allocation5 [shape = 'u8[200704]{0}', space=vmem, size = 0x31000, scoped, tag = 'input window, operand 1, single buffered']
    #allocation6 [shape = 's32[1]{0}', space=sflag, size = 0x4, scoped, tag = 'scoped memory for tpu_custom_call.1']
    #allocation7 [shape = 'u8[32768]{0}', space=vmem, size = 0x8000, scoped, tag = 'input window, operand 3, single buffered']
    #allocation8 [shape = 'u8[4096]{0}', space=vmem, size = 0x1000, scoped, tag = 'output window, operand 0, single buffered']
    %10 = vsyncpa [#allocation3], 0
    %11 = vsyncpa [#allocation6], 0
    %12 = vsyncpa [#allocation4], 0
    // Predicated region
    $region2: #{tpu_custom_call.1} parent=1 // pred_check
      _
    $region3: #{tpu_custom_call.1} parent=1 // pred_check_branch
      %14 = sbr.rel (0) target = $region5
    $region4: #{tpu_custom_call.1} parent=1 // pred_region
      %16 = vsyncadd [#allocation3], 0
      %s18 = sshll.u32 %s0, 4
      %s19 = int_to_ptr.hbm [resolvable:$true] %s18
      %s20 = sshll.u32 [#allocation2], 4
      %s21 = int_to_ptr.vmem [resolvable:$true] %s20
      %23 = dma.hbm_to_vmem [thread:$0]  %s19, 448, %s21, [#allocation3]
    $region5: #{tpu_custom_call.1} parent=1 // pred_fallthru
      _
    // Predicated region
    $region6: #{tpu_custom_call.1} parent=1 // pred_check
      _
    $region7: #{tpu_custom_call.1} parent=1 // pred_check_branch
      %25 = sbr.rel (0) target = $region9
    $region8: #{tpu_custom_call.1} parent=1 // pred_region
      %27 = vsyncadd [#allocation6], 0
      %s28 = sshll.u32 %s1, 4
      %s29 = int_to_ptr.hbm [resolvable:$true] %s28
      %s30 = sshll.u32 [#allocation5], 4
      %s31 = int_to_ptr.vmem [resolvable:$true] %s30
      %36 = dma.hbm_to_vmem [thread:$0]  %s29, 6272, %s31, [#allocation6], 64, 64, 4
    $region9: #{tpu_custom_call.1} parent=1 // pred_fallthru
      _
    // Predicated region
    $region10: #{tpu_custom_call.1} parent=1 // pred_check
      _
    $region11: #{tpu_custom_call.1} parent=1 // pred_check_branch
      %38 = sbr.rel (0) target = $region13
    $region12: #{tpu_custom_call.1} parent=1 // pred_region
      _
    $region13: #{tpu_custom_call.1} parent=1 // pred_fallthru
      _
    // Predicated region
    $region14: #{tpu_custom_call.1} parent=1 // pred_check
      _
    $region15: #{tpu_custom_call.1} parent=1 // pred_check_branch
      %40 = sbr.rel (0) target = $region17
    $region16: #{tpu_custom_call.1} parent=1 // pred_region
      %42 = vsyncadd [#allocation6], 0
      %s43 = sshll.u32 %s3, 4
      %s44 = int_to_ptr.hbm [resolvable:$true] %s43
      %s45 = sshll.u32 [#allocation7], 4
      %s46 = int_to_ptr.vmem [resolvable:$true] %s45
      %51 = dma.hbm_to_vmem [thread:$0]  %s44, 1024, %s46, [#allocation6], 64, 64, 4
    $region17: #{tpu_custom_call.1} parent=1 // pred_fallthru
      _
    // Predicated region
    $region18: #{tpu_custom_call.1} parent=1 // pred_check
      _
    $region19: #{tpu_custom_call.1} parent=1 // pred_check_branch
      %53 = sbr.rel (0) target = $region21
    $region20: #{tpu_custom_call.1} parent=1 // pred_region
      _
    $region21: #{tpu_custom_call.1} parent=1 // pred_fallthru
      _
    // Predicated region
    $region22: #{tpu_custom_call.1} parent=1 // pred_check
      _
    $region23: #{tpu_custom_call.1} parent=1 // pred_check_branch
      %55 = sbr.rel (0) target = $region25
    $region24: #{tpu_custom_call.1} parent=1 // pred_region
      %57 = dma.done [#allocation3], 448
    $region25: #{tpu_custom_call.1} parent=1 // pred_fallthru
      _
    // Predicated region
    $region26: #{tpu_custom_call.1} parent=1 // pred_check
      _
    $region27: #{tpu_custom_call.1} parent=1 // pred_check_branch
      %59 = sbr.rel (0) target = $region29
    $region28: #{tpu_custom_call.1} parent=1 // pred_region
      %61 = dma.done [#allocation6], 6272
    $region29: #{tpu_custom_call.1} parent=1 // pred_fallthru
      _
    // Predicated region
    $region30: #{tpu_custom_call.1} parent=1 // pred_check
      _
    $region31: #{tpu_custom_call.1} parent=1 // pred_check_branch
      %63 = sbr.rel (0) target = $region33
    $region32: #{tpu_custom_call.1} parent=1 // pred_region
      %65 = dma.done [#allocation6], 1024
    $region33: #{tpu_custom_call.1} parent=1 // pred_fallthru
      _
    %v67 = vld [vmem:[#allocation2] sm:$0xff]
    %v68 = vld [vmem:[#allocation2 + $0x8] sm:$0xff]
    %v69 = vld [vmem:[#allocation2 + $0x10] sm:$0xff]
    %v70 = vld [vmem:[#allocation2 + $0x18] sm:$0xf]
    %v71 = vld [vmem:[#allocation5] sm:$0xf]
    %v72 = vld [vmem:[#allocation5 + $0x4] sm:$0xf]
    %v73 = vld [vmem:[#allocation5 + $0x8] sm:$0xf]
    %v74 = vld [vmem:[#allocation5 + $0xc] sm:$0xf]
    %v75 = vld [vmem:[#allocation5 + $0x10] sm:$0xf]
    %v76 = vld [vmem:[#allocation5 + $0x14] sm:$0xf]
    %v77 = vld [vmem:[#allocation5 + $0x18] sm:$0xf]
    %v78 = vld [vmem:[#allocation5 + $0x1c] sm:$0xf]
    %v79 = vld [vmem:[#allocation5 + $0x20] sm:$0xf]
    %v80 = vld [vmem:[#allocation5 + $0x24] sm:$0xf]
    %v81 = vld [vmem:[#allocation5 + $0x28] sm:$0xf]
    %v82 = vld [vmem:[#allocation5 + $0x2c] sm:$0xf]
    %v83 = vld [vmem:[#allocation5 + $0x30] sm:$0xf]
    %v84 = vld [vmem:[#allocation5 + $0x34] sm:$0xf]
    %v85 = vld [vmem:[#allocation5 + $0x38] sm:$0xf]
    %v86 = vld [vmem:[#allocation5 + $0x3c] sm:$0xf]
    %v87 = vld [vmem:[#allocation5 + $0x40] sm:$0xf]
    %v88 = vld [vmem:[#allocation5 + $0x44] sm:$0xf]
    %v89 = vld [vmem:[#allocation5 + $0x48] sm:$0xf]
    %v90 = vld [vmem:[#allocation5 + $0x4c] sm:$0xf]
    %v91 = vld [vmem:[#allocation5 + $0x50] sm:$0xf]
    %v92 = vld [vmem:[#allocation5 + $0x54] sm:$0xf]
    %v93 = vld [vmem:[#allocation5 + $0x58] sm:$0xf]
    %v94 = vld [vmem:[#allocation5 + $0x5c] sm:$0xf]
    %v95 = vld [vmem:[#allocation5 + $0x60] sm:$0xf]
    %v96 = vld [vmem:[#allocation5 + $0x64] sm:$0xf]
    %v97 = vld [vmem:[#allocation5 + $0x68] sm:$0xf]
    %v98 = vld [vmem:[#allocation5 + $0x6c] sm:$0xf]
    %v99 = vld [vmem:[#allocation5 + $0x70] sm:$0xf]
    %v100 = vld [vmem:[#allocation5 + $0x74] sm:$0xf]
    %v101 = vld [vmem:[#allocation5 + $0x78] sm:$0xf]
    %v102 = vld [vmem:[#allocation5 + $0x7c] sm:$0xf]
    %v103 = vld [vmem:[#allocation5 + $0x80] sm:$0xf]
    %v104 = vld [vmem:[#allocation5 + $0x84] sm:$0xf]
    %v105 = vld [vmem:[#allocation5 + $0x88] sm:$0xf]
    %v106 = vld [vmem:[#allocation5 + $0x8c] sm:$0xf]
    %v107 = vld [vmem:[#allocation5 + $0x90] sm:$0xf]
    %v108 = vld [vmem:[#allocation5 + $0x94] sm:$0xf]
    %v109 = vld [vmem:[#allocation5 + $0x98] sm:$0xf]
    %v110 = vld [vmem:[#allocation5 + $0x9c] sm:$0xf]
    %v111 = vld [vmem:[#allocation5 + $0xa0] sm:$0xf]
    %v112 = vld [vmem:[#allocation5 + $0xa4] sm:$0xf]
    %v113 = vld [vmem:[#allocation5 + $0xa8] sm:$0xf]
    %v114 = vld [vmem:[#allocation5 + $0xac] sm:$0xf]
    %v115 = vld [vmem:[#allocation5 + $0xb0] sm:$0xf]
    %v116 = vld [vmem:[#allocation5 + $0xb4] sm:$0xf]
    %v117 = vld [vmem:[#allocation5 + $0xb8] sm:$0xf]
    %v118 = vld [vmem:[#allocation5 + $0xbc] sm:$0xf]
    %v119 = vld [vmem:[#allocation5 + $0xc0] sm:$0xf]
    %v120 = vld [vmem:[#allocation5 + $0xc4] sm:$0xf]
    %v121 = vld [vmem:[#allocation5 + $0xc8] sm:$0xf]
    %v122 = vld [vmem:[#allocation5 + $0xcc] sm:$0xf]
    %v123 = vld [vmem:[#allocation5 + $0xd0] sm:$0xf]
    %v124 = vld [vmem:[#allocation5 + $0xd4] sm:$0xf]
    %v125 = vld [vmem:[#allocation5 + $0xd8] sm:$0xf]
    %v126 = vld [vmem:[#allocation5 + $0xdc] sm:$0xf]
    %v127 = vld [vmem:[#allocation5 + $0xe0] sm:$0xf]
    %v128 = vld [vmem:[#allocation5 + $0xe4] sm:$0xf]
    %v129 = vld [vmem:[#allocation5 + $0xe8] sm:$0xf]
    %v130 = vld [vmem:[#allocation5 + $0xec] sm:$0xf]
    %v131 = vld [vmem:[#allocation5 + $0xf0] sm:$0xf]
    %v132 = vld [vmem:[#allocation5 + $0xf4] sm:$0xf]
    %v133 = vld [vmem:[#allocation5 + $0xf8] sm:$0xf]
    %v134 = vld [vmem:[#allocation5 + $0xfc] sm:$0xf]
    %v135 = vld [vmem:[#allocation5 + $0x100] sm:$0xf]
    %v136 = vld [vmem:[#allocation5 + $0x104] sm:$0xf]
    %v137 = vld [vmem:[#allocation5 + $0x108] sm:$0xf]
    %v138 = vld [vmem:[#allocation5 + $0x10c] sm:$0xf]
    %v139 = vld [vmem:[#allocation5 + $0x110] sm:$0xf]
    %v140 = vld [vmem:[#allocation5 + $0x114] sm:$0xf]
    %v141 = vld [vmem:[#allocation5 + $0x118] sm:$0xf]
    %v142 = vld [vmem:[#allocation5 + $0x11c] sm:$0xf]
    %v143 = vld [vmem:[#allocation5 + $0x120] sm:$0xf]
    %v144 = vld [vmem:[#allocation5 + $0x124] sm:$0xf]
    %v145 = vld [vmem:[#allocation5 + $0x128] sm:$0xf]
    %v146 = vld [vmem:[#allocation5 + $0x12c] sm:$0xf]
    %v147 = vld [vmem:[#allocation5 + $0x130] sm:$0xf]
    %v148 = vld [vmem:[#allocation5 + $0x134] sm:$0xf]
    %v149 = vld [vmem:[#allocation5 + $0x138] sm:$0xf]
    %v150 = vld [vmem:[#allocation5 + $0x13c] sm:$0xf]
    %v151 = vld [vmem:[#allocation5 + $0x140] sm:$0xf]
    %v152 = vld [vmem:[#allocation5 + $0x144] sm:$0xf]
    %v153 = vld [vmem:[#allocation5 + $0x148] sm:$0xf]
    %v154 = vld [vmem:[#allocation5 + $0x14c] sm:$0xf]
    %v155 = vld [vmem:[#allocation5 + $0x150] sm:$0xf]
    %v156 = vld [vmem:[#allocation5 + $0x154] sm:$0xf]
    %v157 = vld [vmem:[#allocation5 + $0x158] sm:$0xf]
    %v158 = vld [vmem:[#allocation5 + $0x15c] sm:$0xf]
    %v159 = vld [vmem:[#allocation5 + $0x160] sm:$0xf]
    %v160 = vld [vmem:[#allocation5 + $0x164] sm:$0xf]
    %v161 = vld [vmem:[#allocation5 + $0x168] sm:$0xf]
    %v162 = vld [vmem:[#allocation5 + $0x16c] sm:$0xf]
    %v163 = vld [vmem:[#allocation5 + $0x170] sm:$0xf]
    %v164 = vld [vmem:[#allocation5 + $0x174] sm:$0xf]
    %v165 = vld [vmem:[#allocation5 + $0x178] sm:$0xf]
    %v166 = vld [vmem:[#allocation5 + $0x17c] sm:$0xf]
    %v167 = vld [vmem:[#allocation5 + $0x180] sm:$0xf]
    %v168 = vld [vmem:[#allocation5 + $0x184] sm:$0xf]
    %v169 = vld [vmem:[%s2] sm:$0x1]
    %v171 = vperm.slane %v169, 0
    %v177 = vunpack.c.l.b16 %v67
    %v178 = vunpack.c.h.b16 %v67
    %v179 = vunpack.c.l.b16 %v68
    %v180 = vunpack.c.h.b16 %v68
    %v181 = vunpack.c.l.b16 %v69
    %v182 = vunpack.c.h.b16 %v69
    %v183 = vunpack.c.l.b16 %v70
    %v184 = vpack.c.b16 %v177, %v177
    %v185 = vpack.c.b16 %v178, %v178
    %v186 = vpack.c.b16 %v179, %v179
    %v187 = vpack.c.b16 %v180, %v180
    %v188 = vpack.c.b16 %v181, %v181
    %v189 = vpack.c.b16 %v182, %v182
    %v190 = vpack.c.b16 %v183, %v183
    %v295 = vunpack.c.l.b16 %v71
    %v296 = vunpack.c.l.b16 %v72
    %v297 = vunpack.c.l.b16 %v73
    %v298 = vunpack.c.l.b16 %v74
    %v299 = vunpack.c.l.b16 %v75
    %v300 = vunpack.c.l.b16 %v76
    %v301 = vunpack.c.l.b16 %v77
    %v302 = vunpack.c.l.b16 %v78
    %v303 = vunpack.c.l.b16 %v79
    %v304 = vunpack.c.l.b16 %v80
    %v305 = vunpack.c.l.b16 %v81
    %v306 = vunpack.c.l.b16 %v82
    %v307 = vunpack.c.l.b16 %v83
    %v308 = vunpack.c.l.b16 %v84
    %v309 = vunpack.c.l.b16 %v85
    %v310 = vunpack.c.l.b16 %v86
    %v311 = vunpack.c.l.b16 %v87
    %v312 = vunpack.c.l.b16 %v88
    %v313 = vunpack.c.l.b16 %v89
    %v314 = vunpack.c.l.b16 %v90
    %v315 = vunpack.c.l.b16 %v91
    %v316 = vunpack.c.l.b16 %v92
    %v317 = vunpack.c.l.b16 %v93
    %v318 = vunpack.c.l.b16 %v94
    %v319 = vunpack.c.l.b16 %v95
    %v320 = vunpack.c.l.b16 %v96
    %v321 = vunpack.c.l.b16 %v97
    %v322 = vunpack.c.l.b16 %v98
    %v323 = vunpack.c.l.b16 %v99
    %v324 = vunpack.c.l.b16 %v100
    %v325 = vunpack.c.l.b16 %v101
    %v326 = vunpack.c.l.b16 %v102
    %v327 = vunpack.c.l.b16 %v103
    %v328 = vunpack.c.l.b16 %v104
    %v329 = vunpack.c.l.b16 %v105
    %v330 = vunpack.c.l.b16 %v106
    %v331 = vunpack.c.l.b16 %v107
    %v332 = vunpack.c.l.b16 %v108
    %v333 = vunpack.c.l.b16 %v109
    %v334 = vunpack.c.l.b16 %v110
    %v335 = vunpack.c.l.b16 %v111
    %v336 = vunpack.c.l.b16 %v112
    %v337 = vunpack.c.l.b16 %v113
    %v338 = vunpack.c.l.b16 %v114
    %v339 = vunpack.c.l.b16 %v115
    %v340 = vunpack.c.l.b16 %v116
    %v341 = vunpack.c.l.b16 %v117
    %v342 = vunpack.c.l.b16 %v118
    %v343 = vunpack.c.l.b16 %v119
    %v344 = vunpack.c.l.b16 %v120
    %v345 = vunpack.c.l.b16 %v121
    %v346 = vunpack.c.l.b16 %v122
    %v347 = vunpack.c.l.b16 %v123
    %v348 = vunpack.c.l.b16 %v124
    %v349 = vunpack.c.l.b16 %v125
    %v350 = vunpack.c.l.b16 %v126
    %v351 = vunpack.c.l.b16 %v127
    %v352 = vunpack.c.l.b16 %v128
    %v353 = vunpack.c.l.b16 %v129
    %v354 = vunpack.c.l.b16 %v130
    %v355 = vunpack.c.l.b16 %v131
    %v356 = vunpack.c.l.b16 %v132
    %v357 = vunpack.c.l.b16 %v133
    %v358 = vunpack.c.l.b16 %v134
    %v359 = vunpack.c.l.b16 %v135
    %v360 = vunpack.c.l.b16 %v136
    %v361 = vunpack.c.l.b16 %v137
    %v362 = vunpack.c.l.b16 %v138
    %v363 = vunpack.c.l.b16 %v139
    %v364 = vunpack.c.l.b16 %v140
    %v365 = vunpack.c.l.b16 %v141
    %v366 = vunpack.c.l.b16 %v142
    %v367 = vunpack.c.l.b16 %v143
    %v368 = vunpack.c.l.b16 %v144
    %v369 = vunpack.c.l.b16 %v145
    %v370 = vunpack.c.l.b16 %v146
    %v371 = vunpack.c.l.b16 %v147
    %v372 = vunpack.c.l.b16 %v148
    %v373 = vunpack.c.l.b16 %v149
    %v374 = vunpack.c.l.b16 %v150
    %v375 = vunpack.c.l.b16 %v151
    %v376 = vunpack.c.l.b16 %v152
    %v377 = vunpack.c.l.b16 %v153
    %v378 = vunpack.c.l.b16 %v154
    %v379 = vunpack.c.l.b16 %v155
    %v380 = vunpack.c.l.b16 %v156
    %v381 = vunpack.c.l.b16 %v157
    %v382 = vunpack.c.l.b16 %v158
    %v383 = vunpack.c.l.b16 %v159
    %v384 = vunpack.c.l.b16 %v160
    %v385 = vunpack.c.l.b16 %v161
    %v386 = vunpack.c.l.b16 %v162
    %v387 = vunpack.c.l.b16 %v163
    %v388 = vunpack.c.l.b16 %v164
    %v389 = vunpack.c.l.b16 %v165
    %v390 = vunpack.c.l.b16 %v166
    %v391 = vunpack.c.l.b16 %v167
    %v392 = vunpack.c.l.b16 %v168
    %v393 = vpack.c.b16 %v296, %v295
    %v394 = vpack.c.b16 %v298, %v297
    %v395 = vpack.c.b16 %v300, %v299
    %v396 = vpack.c.b16 %v302, %v301
    %v397 = vpack.c.b16 %v304, %v303
    %v398 = vpack.c.b16 %v306, %v305
    %v399 = vpack.c.b16 %v308, %v307
    %v400 = vpack.c.b16 %v310, %v309
    %v401 = vpack.c.b16 %v312, %v311
    %v402 = vpack.c.b16 %v314, %v313
    %v403 = vpack.c.b16 %v316, %v315
    %v404 = vpack.c.b16 %v318, %v317
    %v405 = vpack.c.b16 %v320, %v319
    %v406 = vpack.c.b16 %v322, %v321
    %v407 = vpack.c.b16 %v324, %v323
    %v408 = vpack.c.b16 %v326, %v325
    %v409 = vpack.c.b16 %v328, %v327
    %v410 = vpack.c.b16 %v330, %v329
    %v411 = vpack.c.b16 %v332, %v331
    %v412 = vpack.c.b16 %v334, %v333
    %v413 = vpack.c.b16 %v336, %v335
    %v414 = vpack.c.b16 %v338, %v337
    %v415 = vpack.c.b16 %v340, %v339
    %v416 = vpack.c.b16 %v342, %v341
    %v417 = vpack.c.b16 %v344, %v343
    %v418 = vpack.c.b16 %v346, %v345
    %v419 = vpack.c.b16 %v348, %v347
    %v420 = vpack.c.b16 %v350, %v349
    %v421 = vpack.c.b16 %v352, %v351
    %v422 = vpack.c.b16 %v354, %v353
    %v423 = vpack.c.b16 %v356, %v355
    %v424 = vpack.c.b16 %v358, %v357
    %v425 = vpack.c.b16 %v360, %v359
    %v426 = vpack.c.b16 %v362, %v361
    %v427 = vpack.c.b16 %v364, %v363
    %v428 = vpack.c.b16 %v366, %v365
    %v429 = vpack.c.b16 %v368, %v367
    %v430 = vpack.c.b16 %v370, %v369
    %v431 = vpack.c.b16 %v372, %v371
    %v432 = vpack.c.b16 %v374, %v373
    %v433 = vpack.c.b16 %v376, %v375
    %v434 = vpack.c.b16 %v378, %v377
    %v435 = vpack.c.b16 %v380, %v379
    %v436 = vpack.c.b16 %v382, %v381
    %v437 = vpack.c.b16 %v384, %v383
    %v438 = vpack.c.b16 %v386, %v385
    %v439 = vpack.c.b16 %v388, %v387
    %v440 = vpack.c.b16 %v390, %v389
    %v441 = vpack.c.b16 %v392, %v391
    %vm491 = vcmask 130048
    %v493 = vsel %vm491, %v190, 0
    %495 = vmatpush.bf16.msra.mxu0 %v400
    %496 = vmatpush.bf16.msra.mxu0 %v399
    %497 = vmatpush.bf16.msra.mxu0 %v398
    %498 = vmatpush.bf16.msra.mxu0 %v397
    %499 = vmatpush.bf16.msra.mxu0 %v396
    %500 = vmatpush.bf16.msra.mxu0 %v395
    %501 = vmatpush.bf16.msra.mxu0 %v394
    %502 = vmatpush.bf16.msra.mxu0 %v393
    %503 = vmatmul.bf16.gmra.mxu0 %v184
    %v504 = vpop.f32.mrf.mxu0
    %v505 = vadd.f32 %v171, %v504
    %v506 = vpop.f32.mrf.mxu0
    %507 = vdwg.mxu0
    %508 = vmatpush.bf16.msra.mxu0 %v408
    %509 = vmatpush.bf16.msra.mxu0 %v407
    %510 = vmatpush.bf16.msra.mxu0 %v406
    %511 = vmatpush.bf16.msra.mxu0 %v405
    %512 = vmatpush.bf16.msra.mxu0 %v404
    %513 = vmatpush.bf16.msra.mxu0 %v403
    %514 = vmatpush.bf16.msra.mxu0 %v402
    %515 = vmatpush.bf16.msra.mxu0 %v401
    %516 = vmatmul.bf16.gmra.mxu0 %v185
    %v517 = vpop.f32.mrf.mxu0
    %v518 = vadd.f32 %v505, %v517
    %v519 = vpop.f32.mrf.mxu0
    %520 = vdwg.mxu0
    %521 = vmatpush.bf16.msra.mxu0 %v416
    %522 = vmatpush.bf16.msra.mxu0 %v415
    %523 = vmatpush.bf16.msra.mxu0 %v414
    %524 = vmatpush.bf16.msra.mxu0 %v413
    %525 = vmatpush.bf16.msra.mxu0 %v412
    %526 = vmatpush.bf16.msra.mxu0 %v411
    %527 = vmatpush.bf16.msra.mxu0 %v410
    %528 = vmatpush.bf16.msra.mxu0 %v409
    %529 = vmatmul.bf16.gmra.mxu0 %v186
    %v530 = vpop.f32.mrf.mxu0
    %v531 = vadd.f32 %v518, %v530
    %v532 = vpop.f32.mrf.mxu0
    %533 = vdwg.mxu0
    %534 = vmatpush.bf16.msra.mxu0 %v424
    %535 = vmatpush.bf16.msra.mxu0 %v423
    %536 = vmatpush.bf16.msra.mxu0 %v422
    %537 = vmatpush.bf16.msra.mxu0 %v421
    %538 = vmatpush.bf16.msra.mxu0 %v420
    %539 = vmatpush.bf16.msra.mxu0 %v419
    %540 = vmatpush.bf16.msra.mxu0 %v418
    %541 = vmatpush.bf16.msra.mxu0 %v417
    %542 = vmatmul.bf16.gmra.mxu0 %v187
    %v543 = vpop.f32.mrf.mxu0
    %v544 = vadd.f32 %v531, %v543
    %v545 = vpop.f32.mrf.mxu0
    %546 = vdwg.mxu0
    %547 = vmatpush.bf16.msra.mxu0 %v432
    %548 = vmatpush.bf16.msra.mxu0 %v431
    %549 = vmatpush.bf16.msra.mxu0 %v430
    %550 = vmatpush.bf16.msra.mxu0 %v429
    %551 = vmatpush.bf16.msra.mxu0 %v428
    %552 = vmatpush.bf16.msra.mxu0 %v427
    %553 = vmatpush.bf16.msra.mxu0 %v426
    %554 = vmatpush.bf16.msra.mxu0 %v425
    %555 = vmatmul.bf16.gmra.mxu0 %v188
    %v556 = vpop.f32.mrf.mxu0
    %v557 = vadd.f32 %v544, %v556
    %v558 = vpop.f32.mrf.mxu0
    %559 = vdwg.mxu0
    %560 = vmatpush.bf16.msra.mxu0 %v440
    %561 = vmatpush.bf16.msra.mxu0 %v439
    %562 = vmatpush.bf16.msra.mxu0 %v438
    %563 = vmatpush.bf16.msra.mxu0 %v437
    %564 = vmatpush.bf16.msra.mxu0 %v436
    %565 = vmatpush.bf16.msra.mxu0 %v435
    %566 = vmatpush.bf16.msra.mxu0 %v434
    %567 = vmatpush.bf16.msra.mxu0 %v433
    %568 = vmatmul.bf16.gmra.mxu0 %v189
    %v569 = vpop.f32.mrf.mxu0
    %v570 = vadd.f32 %v557, %v569
    %v571 = vpop.f32.mrf.mxu0
    %572 = vdwg.mxu0
    %573 = vmatpush.bf16.msra.mxu0 0
    %574 = vmatpush.bf16.msra.mxu0 0
    %575 = vmatpush.bf16.msra.mxu0 0
    %576 = vmatpush.bf16.msra.mxu0 0
    %577 = vmatpush.bf16.msra.mxu0 0
    %578 = vmatpush.bf16.msra.mxu0 0
    %579 = vmatpush.bf16.msra.mxu0 0
    %580 = vmatpush.bf16.msra.mxu0 %v441
    %581 = vmatmul.bf16.gmra.mxu0 %v493
    %v582 = vpop.f32.mrf.mxu0
    %v583 = vadd.f32 %v570, %v582
    %v584 = vpop.f32.mrf.mxu0
    %585 = vdwg.mxu0
    %v586 = vmax.f32 %v583, 0.0
    %v587 = vpack.c.bf16 %v586, %v586
    %v588 = vld [vmem:[#allocation7] sm:$0xf]
    %v589 = vld [vmem:[#allocation7 + $0x4] sm:$0xf]
    %v590 = vld [vmem:[#allocation7 + $0x8] sm:$0xf]
    %v591 = vld [vmem:[#allocation7 + $0xc] sm:$0xf]
    %v592 = vld [vmem:[#allocation7 + $0x10] sm:$0xf]
    %v593 = vld [vmem:[#allocation7 + $0x14] sm:$0xf]
    %v594 = vld [vmem:[#allocation7 + $0x18] sm:$0xf]
    %v595 = vld [vmem:[#allocation7 + $0x1c] sm:$0xf]
    %v596 = vld [vmem:[#allocation7 + $0x20] sm:$0xf]
    %v597 = vld [vmem:[#allocation7 + $0x24] sm:$0xf]
    %v598 = vld [vmem:[#allocation7 + $0x28] sm:$0xf]
    %v599 = vld [vmem:[#allocation7 + $0x2c] sm:$0xf]
    %v600 = vld [vmem:[#allocation7 + $0x30] sm:$0xf]
    %v601 = vld [vmem:[#allocation7 + $0x34] sm:$0xf]
    %v602 = vld [vmem:[#allocation7 + $0x38] sm:$0xf]
    %v603 = vld [vmem:[#allocation7 + $0x3c] sm:$0xf]
    %v604 = vld [vmem:[%s4] sm:$0x1]
    %v606 = vperm.slane %v604, 0
    %v624 = vunpack.c.l.b16 %v588
    %v625 = vunpack.c.l.b16 %v589
    %v626 = vunpack.c.l.b16 %v590
    %v627 = vunpack.c.l.b16 %v591
    %v628 = vunpack.c.l.b16 %v592
    %v629 = vunpack.c.l.b16 %v593
    %v630 = vunpack.c.l.b16 %v594
    %v631 = vunpack.c.l.b16 %v595
    %v632 = vunpack.c.l.b16 %v596
    %v633 = vunpack.c.l.b16 %v597
    %v634 = vunpack.c.l.b16 %v598
    %v635 = vunpack.c.l.b16 %v599
    %v636 = vunpack.c.l.b16 %v600
    %v637 = vunpack.c.l.b16 %v601
    %v638 = vunpack.c.l.b16 %v602
    %v639 = vunpack.c.l.b16 %v603
    %v640 = vpack.c.b16 %v625, %v624
    %v641 = vpack.c.b16 %v627, %v626
    %v642 = vpack.c.b16 %v629, %v628
    %v643 = vpack.c.b16 %v631, %v630
    %v644 = vpack.c.b16 %v633, %v632
    %v645 = vpack.c.b16 %v635, %v634
    %v646 = vpack.c.b16 %v637, %v636
    %v647 = vpack.c.b16 %v639, %v638
    %656 = vmatpush.bf16.msra.mxu0 %v647
    %657 = vmatpush.bf16.msra.mxu0 %v646
    %658 = vmatpush.bf16.msra.mxu0 %v645
    %659 = vmatpush.bf16.msra.mxu0 %v644
    %660 = vmatpush.bf16.msra.mxu0 %v643
    %661 = vmatpush.bf16.msra.mxu0 %v642
    %662 = vmatpush.bf16.msra.mxu0 %v641
    %663 = vmatpush.bf16.msra.mxu0 %v640
    %664 = vmatmul.bf16.gmra.mxu0 %v587
    %v665 = vpop.f32.mrf.mxu0
    %v666 = vadd.f32 %v606, %v665
    %v667 = vpop.f32.mrf.mxu0
    %668 = vdwg.mxu0
    %669 = vst [vmem:[#allocation8] sm:$0xff] %v666
    // Predicated region
    $region34: #{tpu_custom_call.1} parent=1 // pred_check
      _
    $region35: #{tpu_custom_call.1} parent=1 // pred_check_branch
      %671 = sbr.rel (0) target = $region37
    $region36: #{tpu_custom_call.1} parent=1 // pred_region
      %673 = vsyncadd [#allocation4], 0
      %s675 = sshll.u32 [#allocation8], 4
      %s676 = int_to_ptr.vmem [resolvable:$true] %s675
      %s677 = sshll.u32 %s5, 4
      %s678 = int_to_ptr.hbm [resolvable:$true] %s677
      %680 = dma.vmem_to_hbm [thread:$0]  %s676, 128, %s678, [#allocation4]
    $region37: #{tpu_custom_call.1} parent=1 // pred_fallthru
      _
    // Predicated region
    $region38: #{tpu_custom_call.1} parent=1 // pred_check
      _
    $region39: #{tpu_custom_call.1} parent=1 // pred_check_branch
      %682 = sbr.rel (0) target = $region41
    $region40: #{tpu_custom_call.1} parent=1 // pred_region
      %684 = dma.done [#allocation4], 128
    $region41: #{tpu_custom_call.1} parent=1 // pred_fallthru
      _
    %685 = vsyncpa [#allocation3], 1
    %686 = vsyncpa [#allocation6], 1
    %687 = vsyncpa [#allocation4], 1

</llo_original>
